<compile_context>
chip_gen: v5e
topology: v5e:2x2
jax: 0.10.0
libtpu: 0.0.40
codegen_flags: <defaults>
</compile_context>

<pallas_src>
import functools

import numpy as np
import jax
import jax.numpy as jnp
from jax import lax
from jax.experimental import pallas as pl
from jax.experimental.pallas import tpu as pltpu

VMEM = pl.BlockSpec(memory_space=pltpu.MemorySpace.VMEM)
MXU_DTYPE = jnp.bfloat16  # matmul operand dtype; accumulation is always f32


def _leaky_relu(x, slope):
    return jnp.where(x > 0, x, slope * x)


def _elu(x):
    # nn.ELU(alpha=1): x if x>0 else exp(x)-1 (clamp arg to avoid inf in the dead branch)
    return jnp.where(x > 0, x, jnp.exp(jnp.minimum(x, 0.0)) - 1.0)


# ----------------------------------------------------------------------------
# Single fused kernel: block-diagonal stem + all GATConv layers
# ----------------------------------------------------------------------------
def _gat_forward_kernel(x_ref, w_stem_ref, b_stem_ref, adj_ref, *refs,
                        layer_specs, negative_slope):
    """refs layout: per layer (W, att_src, att_dst, bias), then the output ref.
       layer_specs: tuple of (heads, d_out, concat, apply_elu) -- static."""
    layer_refs = []
    idx = 0
    for _ in layer_specs:
        layer_refs.append(refs[idx:idx + 4])
        idx += 4
    o_ref = refs[idx]

    # Additive adjacency mask, computed ONCE for the whole call (hoisted out of the
    # per-head / per-layer loops). Kept in f32 so -1e30 never overflows.
    adj = adj_ref[...]                                           # [N, N] bf16 (binary)
    mask_bias = jnp.where(adj > 0, jnp.float32(0.0), jnp.float32(-1e30))

    # ---- stem: one block-diagonal matmul (all node types at once) + bias + ReLU.
    # Dropout is identity in eval mode. Everything stays resident in VMEM.
    x = jnp.dot(x_ref[...].astype(MXU_DTYPE), w_stem_ref[...].astype(MXU_DTYPE),
                preferred_element_type=jnp.float32)              # [N, n_hid]
    x = jnp.maximum(x + b_stem_ref[...], 0.0)

    # ---- GATConv layers, fully fused (no HBM bounce of z / attention / alpha)
    for (heads, d_out, concat, apply_elu), (w_ref, asrc_ref, adst_ref, bias_ref) in zip(
            layer_specs, layer_refs):
        z = jnp.dot(x.astype(MXU_DTYPE), w_ref[...].astype(MXU_DTYPE),
                    preferred_element_type=jnp.float32)          # [N, H*D]
        a_src = asrc_ref[...]                                    # [H, D] f32
        a_dst = adst_ref[...]                                    # [H, D] f32

        head_outs = []
        for h in range(heads):
            zh = z[:, h * d_out:(h + 1) * d_out]                 # [N, D] f32
            zh_bf = zh.astype(MXU_DTYPE)                         # shared bf16 MXU operand
            # destination scores as a sublane-oriented column
            s_dst = jnp.sum(zh * a_dst[h:h + 1, :], axis=1, keepdims=True)       # [N, 1]
            # source scores as a lane-oriented row straight off the MXU (bf16 operands)
            s_src = lax.dot_general(a_src[h:h + 1, :].astype(MXU_DTYPE), zh_bf,
                                    (((1,), (1,)), ((), ())),
                                    preferred_element_type=jnp.float32)          # [1, N]
            # e[i, j] = LeakyReLU(s_dst[i] + s_src[j]) + mask;  adj[i, j] = edge j -> i
            e = _leaky_relu(s_dst + s_src, negative_slope) + mask_bias           # [N, N]
            m = jnp.max(e, axis=1, keepdims=True)                # finite: self-loops exist
            p = jnp.exp(e - m)                                   # masked entries -> exact 0
            denom = jnp.sum(p, axis=1, keepdims=True)            # [N, 1], >= 1
            p_bf = p.astype(MXU_DTYPE)                           # only bf16 [N,N] stays live
            # deferred normalization: unnormalized attention matmul, then one [N,D] scale
            acc = jnp.dot(p_bf, zh_bf, preferred_element_type=jnp.float32)       # [N, D]
            head_outs.append(acc * pl.reciprocal(denom, approx=True))
            # attention dropout: identity (eval mode)

        if concat:
            # TODO(synk): for heads > 1, write each head directly into a VMEM scratch slice
            # instead of concatenating, to bound the live set to one head.
            out = head_outs[0] if heads == 1 else jnp.concatenate(head_outs, axis=1)
        else:
            out = head_outs[0]
            for h in range(1, heads):
                out = out + head_outs[h]
            out = out * (1.0 / heads)
        out = out + bias_ref[...]
        if apply_elu:
            out = _elu(out)
        x = out                                                  # dropout: identity (eval)

    o_ref[...] = x                                               # lane-dense padded slab


# ----------------------------------------------------------------------------
# Wrapper: builds block-diagonal stem, lane-dense-padded last layer, one pallas_call
# ----------------------------------------------------------------------------
def _round_up(x, m):
    return ((x + m - 1) // m) * m


def gat_forward(params, x_dict, adj, node_type_order, *, negative_slope=0.2):
    """Whole GAT forward in one pallas_call (launch/DMA-latency bound at these sizes)."""
    xs = [x_dict[nt] for nt in node_type_order]
    n_rows = [int(x.shape[0]) for x in xs]
    n_cols = [int(x.shape[1]) for x in xs]
    n_total = sum(n_rows)
    k_total = sum(n_cols)
    n_hid = int(params["fc1"][node_type_order[0]]["w"].shape[1])

    # --- fused stem operands: block-diagonal features, stacked weights, per-row bias
    blocks = []
    col_off = 0
    for x, k in zip(xs, n_cols):
        left = jnp.zeros((x.shape[0], col_off), jnp.float32)
        right = jnp.zeros((x.shape[0], k_total - col_off - k), jnp.float32)
        blocks.append(jnp.concatenate([left, x.astype(jnp.float32), right], axis=1))
        col_off += k
    x_blockdiag = jnp.concatenate(blocks, axis=0)                         # [N, sum(K_t)]
    w_stem = jnp.concatenate([params["fc1"][nt]["w"] for nt in node_type_order], axis=0)
    b_stem = jnp.concatenate(
        [jnp.broadcast_to(params["fc1"][nt]["b"], (r, n_hid))
         for nt, r in zip(node_type_order, n_rows)], axis=0)              # [N, n_hid]

    # --- per-layer params; last layer zero-padded to a lane-dense output width
    args = [x_blockdiag, w_stem, b_stem, adj.astype(jnp.bfloat16)]
    layer_specs = []
    n_layers = len(params["layers"])
    n_out_real = None
    for li, lp in enumerate(params["layers"]):
        heads, d_out = int(lp["att_src"].shape[0]), int(lp["att_src"].shape[1])
        w, a_src, a_dst, bias = lp["w"], lp["att_src"], lp["att_dst"], lp["bias"]
        concat = bool(lp["concat"])
        if li == n_layers - 1:
            n_out_real = heads * d_out if concat else d_out
            d_pad = _round_up(d_out, 128)
            if d_pad != d_out:
                n_in = int(w.shape[0])
                w = jnp.pad(w.reshape(n_in, heads, d_out),
                            ((0, 0), (0, 0), (0, d_pad - d_out))).reshape(n_in, heads * d_pad)
                a_src = jnp.pad(a_src, ((0, 0), (0, d_pad - d_out)))
                a_dst = jnp.pad(a_dst, ((0, 0), (0, d_pad - d_out)))
                if concat:
                    bias = jnp.pad(bias.reshape(1, heads, d_out),
                                   ((0, 0), (0, 0), (0, d_pad - d_out))).reshape(1, heads * d_pad)
                else:
                    bias = jnp.pad(bias, ((0, 0), (0, d_pad - d_out)))
                d_out = d_pad
        args += [w, a_src, a_dst, bias]
        layer_specs.append((heads, d_out, concat, li < n_layers - 1))

    h_last, d_last, concat_last, _ = layer_specs[-1]
    out_width = h_last * d_last if concat_last else d_last               # lane-dense (>=128)

    kernel = functools.partial(
        _gat_forward_kernel,
        layer_specs=tuple(layer_specs),
        negative_slope=negative_slope,
    )
    out_padded = pl.pallas_call(
        kernel,
        out_shape=jax.ShapeDtypeStruct((n_total, out_width), jnp.float32),
        in_specs=[VMEM] * len(args),
        out_specs=VMEM,
        compiler_params=pltpu.CompilerParams(vmem_limit_bytes=48 * 1024 * 1024),
    )(*args)
    # Strip the lane-padding columns outside the kernel (cheap XLA slice).
    return out_padded[:, :n_out_real]


# ----------------------------------------------------------------------------
# Pure-JAX reference (f32) for correctness checking
# ----------------------------------------------------------------------------
def gat_forward_ref(params, x_dict, adj, node_type_order, *, negative_slope=0.2):
    xs = []
    for nt in node_type_order:
        y = x_dict[nt] @ params["fc1"][nt]["w"] + params["fc1"][nt]["b"]
        xs.append(jax.nn.relu(y))
    x = jnp.concatenate(xs, axis=0)
    n_layers = len(params["layers"])
    for li, lp in enumerate(params["layers"]):
        heads, d_out = lp["att_src"].shape
        z = x @ lp["w"]
        outs = []
        for h in range(heads):
            zh = z[:, h * d_out:(h + 1) * d_out]
            s_src = zh @ lp["att_src"][h]
            s_dst = zh @ lp["att_dst"][h]
            e = jax.nn.leaky_relu(s_dst[:, None] + s_src[None, :], negative_slope)
            e = jnp.where(adj > 0, e, -jnp.inf)
            a = jax.nn.softmax(e, axis=1)
            a = jnp.where(adj > 0, a, 0.0)
            outs.append(a @ zh)
        out = jnp.concatenate(outs, axis=1) if lp["concat"] else sum(outs) / heads
        out = out + lp["bias"]
        if li < n_layers - 1:
            out = jax.nn.elu(out)
        x = out
    return x


# ----------------------------------------------------------------------------
# Deterministic parameter / input construction
# ----------------------------------------------------------------------------
def _dense(key, shape, scale=0.1):
    return (scale * jax.random.normal(key, shape)).astype(jnp.float32)


def make_params(key, n_in_dict, node_type_order, n_hid, n_out, hop, heads, out_heads):
    keys = iter(jax.random.split(key, 128))
    params = {"fc1": {}, "layers": []}
    for nt in node_type_order:
        params["fc1"][nt] = {"w": _dense(next(keys), (n_in_dict[nt], n_hid)),
                             "b": _dense(next(keys), (1, n_hid))}
    n_in = n_hid
    for _ in range(hop - 1):
        params["layers"].append({
            "w": _dense(next(keys), (n_in, heads * n_hid)),
            "att_src": _dense(next(keys), (heads, n_hid)),
            "att_dst": _dense(next(keys), (heads, n_hid)),
            "bias": _dense(next(keys), (1, heads * n_hid)),
            "concat": True,
        })
        n_in = heads * n_hid
    params["layers"].append({
        "w": _dense(next(keys), (n_in, out_heads * n_out)),
        "att_src": _dense(next(keys), (out_heads, n_out)),
        "att_dst": _dense(next(keys), (out_heads, n_out)),
        "bias": _dense(next(keys), (1, n_out)),
        "concat": False,
    })
    return params


def edge_index_to_dense_adj(edge_index, n):
    """adj[dst, src] = 1 for every edge src->dst, plus self-loops (GATConv default)."""
    adj = jnp.zeros((n, n), jnp.float32)
    adj = adj.at[edge_index[1], edge_index[0]].set(1.0)
    return jnp.maximum(adj, jnp.eye(n, dtype=jnp.float32))


if __name__ == "__main__":
    key = jax.random.PRNGKey(0)

    n_in_dict = {"author": 12, "paper": 20}
    n_nodes = {"author": 16, "paper": 24}
    node_type_order = ("author", "paper")
    n_hid, n_out, hop = 128, 8, 2            # n_hid=128 keeps hidden vregs lane-dense
    heads, out_heads, neg_slope = 1, 1, 0.2
    N = sum(n_nodes[nt] for nt in node_type_order)

    k_param, k_feat, k_edge = jax.random.split(key, 3)
    params = make_params(k_param, n_in_dict, node_type_order,
                         n_hid, n_out, hop, heads, out_heads)

    fkeys = iter(jax.random.split(k_feat, 8))
    x_dict = {nt: _dense(next(fkeys), (n_nodes[nt], n_in_dict[nt]), scale=1.0)
              for nt in node_type_order}

    # Random directed edge_index over the concatenated node set (deterministic).
    mask = np.array(jax.random.uniform(k_edge, (N, N)) > 0.75)
    src_np, dst_np = np.nonzero(mask)
    edge_index = jnp.array(np.stack([src_np, dst_np]), dtype=jnp.int32)
    adj = edge_index_to_dense_adj(edge_index, N)

    out = gat_forward(params, x_dict, adj, node_type_order, negative_slope=neg_slope)
    out = jax.block_until_ready(out)

    ref = gat_forward_ref(params, x_dict, adj, node_type_order, negative_slope=neg_slope)

    assert out.shape == (N, n_out)
    assert bool(jnp.all(jnp.isfinite(out)))
    assert bool(jnp.allclose(out, ref, rtol=5e-2, atol=5e-2)), \
        "Pallas output does not match pure-JAX reference"
    print("KERNEL_OK")
</pallas_src>

<mosaic_0001>
module attributes {stable_mosaic.version = 11 : i64} {
  func.func @_gat_forward_kernel(%arg0: memref<40x32xf32, #tpu.memory_space<vmem>>, %arg1: memref<32x128xf32, #tpu.memory_space<vmem>>, %arg2: memref<40x128xf32, #tpu.memory_space<vmem>>, %arg3: memref<40x40xbf16, #tpu.memory_space<vmem>>, %arg4: memref<128x128xf32, #tpu.memory_space<vmem>>, %arg5: memref<1x128xf32, #tpu.memory_space<vmem>>, %arg6: memref<1x128xf32, #tpu.memory_space<vmem>>, %arg7: memref<1x128xf32, #tpu.memory_space<vmem>>, %arg8: memref<128x128xf32, #tpu.memory_space<vmem>>, %arg9: memref<1x128xf32, #tpu.memory_space<vmem>>, %arg10: memref<1x128xf32, #tpu.memory_space<vmem>>, %arg11: memref<1x128xf32, #tpu.memory_space<vmem>>, %arg12: memref<40x128xf32, #tpu.memory_space<vmem>>) attributes {dimension_semantics = [], scalar_prefetch = 0 : i64, scratch_operands = 0 : i64, tpu.core_type = #tpu.core_type<tc>} {
    %c0 = arith.constant 0 : index
    %c0_0 = arith.constant 0 : index
    %0 = vector.load %arg3[%c0, %c0_0] : memref<40x40xbf16, #tpu.memory_space<vmem>>, vector<40x40xbf16>
    %cst = arith.constant 0.000000e+00 : bf16
    %1 = vector.broadcast %cst : bf16 to vector<40x40xbf16>
    %2 = arith.cmpf ogt, %0, %1 : vector<40x40xbf16>
    %cst_1 = arith.constant 0.000000e+00 : f32
    %cst_2 = arith.constant -1.000000e+30 : f32
    %3 = vector.broadcast %cst_1 : f32 to vector<40x40xf32>
    %4 = vector.broadcast %cst_2 : f32 to vector<40x40xf32>
    %5 = arith.select %2, %3, %4 : vector<40x40xi1>, vector<40x40xf32>
    %c0_3 = arith.constant 0 : index
    %c0_4 = arith.constant 0 : index
    %6 = vector.load %arg0[%c0_3, %c0_4] : memref<40x32xf32, #tpu.memory_space<vmem>>, vector<40x32xf32>
    %7 = arith.truncf %6 : vector<40x32xf32> to vector<40x32xbf16>
    %c0_5 = arith.constant 0 : index
    %c0_6 = arith.constant 0 : index
    %8 = vector.load %arg1[%c0_5, %c0_6] : memref<32x128xf32, #tpu.memory_space<vmem>>, vector<32x128xf32>
    %9 = arith.truncf %8 : vector<32x128xf32> to vector<32x128xbf16>
    %cst_7 = arith.constant dense<0.000000e+00> : vector<40x128xf32>
    %10 = tpu.matmul %7, %9, %cst_7 {dimension_numbers = #tpu.dot_dimension_numbers<[1], [0], [0], [1], [0, 0, 1, 1], [], []>} : vector<40x32xbf16>, vector<32x128xbf16>, vector<40x128xf32> -> vector<40x128xf32>
    %c0_8 = arith.constant 0 : index
    %c0_9 = arith.constant 0 : index
    %11 = vector.load %arg2[%c0_8, %c0_9] : memref<40x128xf32, #tpu.memory_space<vmem>>, vector<40x128xf32>
    %12 = arith.addf %10, %11 : vector<40x128xf32>
    %cst_10 = arith.constant 0.000000e+00 : f32
    %13 = vector.broadcast %cst_10 : f32 to vector<40x128xf32>
    %14 = arith.maximumf %12, %13 : vector<40x128xf32>
    %15 = arith.truncf %14 : vector<40x128xf32> to vector<40x128xbf16>
    %c0_11 = arith.constant 0 : index
    %c0_12 = arith.constant 0 : index
    %16 = vector.load %arg4[%c0_11, %c0_12] : memref<128x128xf32, #tpu.memory_space<vmem>>, vector<128x128xf32>
    %17 = arith.truncf %16 : vector<128x128xf32> to vector<128x128xbf16>
    %cst_13 = arith.constant dense<0.000000e+00> : vector<40x128xf32>
    %18 = tpu.matmul %15, %17, %cst_13 {dimension_numbers = #tpu.dot_dimension_numbers<[1], [0], [0], [1], [0, 0, 1, 1], [], []>} : vector<40x128xbf16>, vector<128x128xbf16>, vector<40x128xf32> -> vector<40x128xf32>
    %c0_14 = arith.constant 0 : index
    %c0_15 = arith.constant 0 : index
    %19 = vector.load %arg5[%c0_14, %c0_15] : memref<1x128xf32, #tpu.memory_space<vmem>>, vector<1x128xf32>
    %c0_16 = arith.constant 0 : index
    %c0_17 = arith.constant 0 : index
    %20 = vector.load %arg6[%c0_16, %c0_17] : memref<1x128xf32, #tpu.memory_space<vmem>>, vector<1x128xf32>
    %21 = arith.truncf %18 : vector<40x128xf32> to vector<40x128xbf16>
    %22 = vector.broadcast %20 : vector<1x128xf32> to vector<40x128xf32>
    %23 = arith.mulf %18, %22 : vector<40x128xf32>
    %cst_18 = arith.constant dense<0.000000e+00> : vector<40xf32>
    %24 = vector.multi_reduction <add>, %23, %cst_18 [1] : vector<40x128xf32> to vector<40xf32>
    %25 = vector.shape_cast %24 : vector<40xf32> to vector<40x1xf32>
    %26 = arith.truncf %19 : vector<1x128xf32> to vector<1x128xbf16>
    %cst_19 = arith.constant dense<0.000000e+00> : vector<1x40xf32>
    %27 = tpu.matmul %26, %21, %cst_19 {dimension_numbers = #tpu.dot_dimension_numbers<[1], [1], [0], [0], [0, 0, 1, 0], [], []>} : vector<1x128xbf16>, vector<40x128xbf16>, vector<1x40xf32> -> vector<1x40xf32>
    %28 = vector.broadcast %25 : vector<40x1xf32> to vector<40x40xf32>
    %29 = vector.broadcast %27 : vector<1x40xf32> to vector<40x40xf32>
    %30 = arith.addf %28, %29 : vector<40x40xf32>
    %cst_20 = arith.constant 0.000000e+00 : f32
    %31 = vector.broadcast %cst_20 : f32 to vector<40x40xf32>
    %32 = arith.cmpf ogt, %30, %31 : vector<40x40xf32>
    %cst_21 = arith.constant 2.000000e-01 : f32
    %33 = vector.broadcast %cst_21 : f32 to vector<40x40xf32>
    %34 = arith.mulf %33, %30 : vector<40x40xf32>
    %35 = arith.select %32, %30, %34 : vector<40x40xi1>, vector<40x40xf32>
    %36 = arith.addf %35, %5 : vector<40x40xf32>
    %cst_22 = arith.constant dense<0xFF800000> : vector<40xf32>
    %37 = vector.multi_reduction <maximumf>, %36, %cst_22 [1] : vector<40x40xf32> to vector<40xf32>
    %38 = vector.shape_cast %37 : vector<40xf32> to vector<40x1xf32>
    %39 = vector.broadcast %38 : vector<40x1xf32> to vector<40x40xf32>
    %40 = arith.subf %36, %39 : vector<40x40xf32>
    %41 = math.exp %40 : vector<40x40xf32>
    %cst_23 = arith.constant dense<0.000000e+00> : vector<40xf32>
    %42 = vector.multi_reduction <add>, %41, %cst_23 [1] : vector<40x40xf32> to vector<40xf32>
    %43 = vector.shape_cast %42 : vector<40xf32> to vector<40x1xf32>
    %44 = arith.truncf %41 : vector<40x40xf32> to vector<40x40xbf16>
    %cst_24 = arith.constant dense<0.000000e+00> : vector<40x128xf32>
    %45 = tpu.matmul %44, %21, %cst_24 {dimension_numbers = #tpu.dot_dimension_numbers<[1], [0], [0], [1], [0, 0, 1, 1], [], []>} : vector<40x40xbf16>, vector<40x128xbf16>, vector<40x128xf32> -> vector<40x128xf32>
    %46 = tpu.reciprocal %43 {approx = true} : vector<40x1xf32> -> vector<40x1xf32>
    %47 = vector.broadcast %46 : vector<40x1xf32> to vector<40x128xf32>
    %48 = arith.mulf %45, %47 : vector<40x128xf32>
    %c0_25 = arith.constant 0 : index
    %c0_26 = arith.constant 0 : index
    %49 = vector.load %arg7[%c0_25, %c0_26] : memref<1x128xf32, #tpu.memory_space<vmem>>, vector<1x128xf32>
    %50 = vector.broadcast %49 : vector<1x128xf32> to vector<40x128xf32>
    %51 = arith.addf %48, %50 : vector<40x128xf32>
    %cst_27 = arith.constant 0.000000e+00 : f32
    %52 = vector.broadcast %cst_27 : f32 to vector<40x128xf32>
    %53 = arith.cmpf ogt, %51, %52 : vector<40x128xf32>
    %cst_28 = arith.constant 0.000000e+00 : f32
    %54 = vector.broadcast %cst_28 : f32 to vector<40x128xf32>
    %55 = arith.minimumf %51, %54 : vector<40x128xf32>
    %56 = math.exp %55 : vector<40x128xf32>
    %cst_29 = arith.constant 1.000000e+00 : f32
    %57 = vector.broadcast %cst_29 : f32 to vector<40x128xf32>
    %58 = arith.subf %56, %57 : vector<40x128xf32>
    %59 = arith.select %53, %51, %58 : vector<40x128xi1>, vector<40x128xf32>
    %60 = arith.truncf %59 : vector<40x128xf32> to vector<40x128xbf16>
    %c0_30 = arith.constant 0 : index
    %c0_31 = arith.constant 0 : index
    %61 = vector.load %arg8[%c0_30, %c0_31] : memref<128x128xf32, #tpu.memory_space<vmem>>, vector<128x128xf32>
    %62 = arith.truncf %61 : vector<128x128xf32> to vector<128x128xbf16>
    %cst_32 = arith.constant dense<0.000000e+00> : vector<40x128xf32>
    %63 = tpu.matmul %60, %62, %cst_32 {dimension_numbers = #tpu.dot_dimension_numbers<[1], [0], [0], [1], [0, 0, 1, 1], [], []>} : vector<40x128xbf16>, vector<128x128xbf16>, vector<40x128xf32> -> vector<40x128xf32>
    %c0_33 = arith.constant 0 : index
    %c0_34 = arith.constant 0 : index
    %64 = vector.load %arg9[%c0_33, %c0_34] : memref<1x128xf32, #tpu.memory_space<vmem>>, vector<1x128xf32>
    %c0_35 = arith.constant 0 : index
    %c0_36 = arith.constant 0 : index
    %65 = vector.load %arg10[%c0_35, %c0_36] : memref<1x128xf32, #tpu.memory_space<vmem>>, vector<1x128xf32>
    %66 = arith.truncf %63 : vector<40x128xf32> to vector<40x128xbf16>
    %67 = vector.broadcast %65 : vector<1x128xf32> to vector<40x128xf32>
    %68 = arith.mulf %63, %67 : vector<40x128xf32>
    %cst_37 = arith.constant dense<0.000000e+00> : vector<40xf32>
    %69 = vector.multi_reduction <add>, %68, %cst_37 [1] : vector<40x128xf32> to vector<40xf32>
    %70 = vector.shape_cast %69 : vector<40xf32> to vector<40x1xf32>
    %71 = arith.truncf %64 : vector<1x128xf32> to vector<1x128xbf16>
    %cst_38 = arith.constant dense<0.000000e+00> : vector<1x40xf32>
    %72 = tpu.matmul %71, %66, %cst_38 {dimension_numbers = #tpu.dot_dimension_numbers<[1], [1], [0], [0], [0, 0, 1, 0], [], []>} : vector<1x128xbf16>, vector<40x128xbf16>, vector<1x40xf32> -> vector<1x40xf32>
    %73 = vector.broadcast %70 : vector<40x1xf32> to vector<40x40xf32>
    %74 = vector.broadcast %72 : vector<1x40xf32> to vector<40x40xf32>
    %75 = arith.addf %73, %74 : vector<40x40xf32>
    %cst_39 = arith.constant 0.000000e+00 : f32
    %76 = vector.broadcast %cst_39 : f32 to vector<40x40xf32>
    %77 = arith.cmpf ogt, %75, %76 : vector<40x40xf32>
    %cst_40 = arith.constant 2.000000e-01 : f32
    %78 = vector.broadcast %cst_40 : f32 to vector<40x40xf32>
    %79 = arith.mulf %78, %75 : vector<40x40xf32>
    %80 = arith.select %77, %75, %79 : vector<40x40xi1>, vector<40x40xf32>
    %81 = arith.addf %80, %5 : vector<40x40xf32>
    %cst_41 = arith.constant dense<0xFF800000> : vector<40xf32>
    %82 = vector.multi_reduction <maximumf>, %81, %cst_41 [1] : vector<40x40xf32> to vector<40xf32>
    %83 = vector.shape_cast %82 : vector<40xf32> to vector<40x1xf32>
    %84 = vector.broadcast %83 : vector<40x1xf32> to vector<40x40xf32>
    %85 = arith.subf %81, %84 : vector<40x40xf32>
    %86 = math.exp %85 : vector<40x40xf32>
    %cst_42 = arith.constant dense<0.000000e+00> : vector<40xf32>
    %87 = vector.multi_reduction <add>, %86, %cst_42 [1] : vector<40x40xf32> to vector<40xf32>
    %88 = vector.shape_cast %87 : vector<40xf32> to vector<40x1xf32>
    %89 = arith.truncf %86 : vector<40x40xf32> to vector<40x40xbf16>
    %cst_43 = arith.constant dense<0.000000e+00> : vector<40x128xf32>
    %90 = tpu.matmul %89, %66, %cst_43 {dimension_numbers = #tpu.dot_dimension_numbers<[1], [0], [0], [1], [0, 0, 1, 1], [], []>} : vector<40x40xbf16>, vector<40x128xbf16>, vector<40x128xf32> -> vector<40x128xf32>
    %91 = tpu.reciprocal %88 {approx = true} : vector<40x1xf32> -> vector<40x1xf32>
    %92 = vector.broadcast %91 : vector<40x1xf32> to vector<40x128xf32>
    %93 = arith.mulf %90, %92 : vector<40x128xf32>
    %cst_44 = arith.constant 1.000000e+00 : f32
    %94 = vector.broadcast %cst_44 : f32 to vector<40x128xf32>
    %95 = arith.mulf %93, %94 : vector<40x128xf32>
    %c0_45 = arith.constant 0 : index
    %c0_46 = arith.constant 0 : index
    %96 = vector.load %arg11[%c0_45, %c0_46] : memref<1x128xf32, #tpu.memory_space<vmem>>, vector<1x128xf32>
    %97 = vector.broadcast %96 : vector<1x128xf32> to vector<40x128xf32>
    %98 = arith.addf %95, %97 : vector<40x128xf32>
    %c0_47 = arith.constant 0 : index
    %c0_48 = arith.constant 0 : index
    %99 = vector.load %arg12[%c0_47, %c0_48] : memref<40x128xf32, #tpu.memory_space<vmem>>, vector<40x128xf32>
    tpu.vector_store %arg12[%c0_47, %c0_48], %98 {strides = array<i32>} : memref<40x128xf32, #tpu.memory_space<vmem>>, vector<40x128xf32>,
    return
  }
}

</mosaic_0001>

<llo_original>
// kernel: tpu_custom_call.1
$region0: #{tpu_custom_call.1}
  #allocation0 [shape = 'u32[]', space=smem, size = 0x4, offset = 0x4, fixed_abs, tag = 'smem constant byte address 0x4 - core index']
  #allocation1 [shape = 'u32[72,128]{1,0:T(1,128)}', space=vmem, size = 0x9000, scoped, tag = 'internal scratch']
  %s0 = inlined_call_operand.vmem [shape: f32[40,32], index: 0, kind: input, shape index: {}]
  %s1 = inlined_call_operand.vmem [shape: f32[32,128], index: 1, kind: input, shape index: {}]
  %s2 = inlined_call_operand.vmem [shape: f32[40,128], index: 2, kind: input, shape index: {}]
  %s3 = inlined_call_operand.hbm [shape: bf16[40,40], index: 3, kind: input, shape index: {}]
  %s4 = inlined_call_operand.hbm [shape: f32[128,128], index: 4, kind: input, shape index: {}]
  %s5 = inlined_call_operand.vmem [shape: f32[1,128], index: 5, kind: input, shape index: {}]
  %s6 = inlined_call_operand.vmem [shape: f32[1,128], index: 6, kind: input, shape index: {}]
  %s7 = inlined_call_operand.vmem [shape: f32[1,128], index: 7, kind: input, shape index: {}]
  %s8 = inlined_call_operand.hbm [shape: f32[128,128], index: 8, kind: input, shape index: {}]
  %s9 = inlined_call_operand.vmem [shape: f32[1,128], index: 9, kind: input, shape index: {}]
  %s10 = inlined_call_operand.vmem [shape: f32[1,128], index: 10, kind: input, shape index: {}]
  %s11 = inlined_call_operand.vmem [shape: f32[1,128], index: 11, kind: input, shape index: {}]
  %s12 = inlined_call_operand.hbm [shape: f32[40,128], index: 12, kind: output, shape index: {}]
  %s13 = sld [smem:[#allocation0]]
  $region70: #{tpu_custom_call.1} parent=0
    _
  %s15 = ssub.s32 1, %s13
  %s16 = scalar_select 0, %s15, %s13
  $region1: #{tpu_custom_call.1} parent=0
    #allocation2 [shape = 'u8[10240]{0}', space=vmem, size = 0x2800, scoped, tag = 'input window, operand 3, single buffered']
    #allocation3 [shape = 's32[1]{0}', space=sflag, size = 0x4, scoped, tag = 'scoped memory for tpu_custom_call.1']
    #allocation4 [shape = 's32[1]{0}', space=sflag, size = 0x4, scoped, tag = 'scoped memory for tpu_custom_call.1']
    #allocation5 [shape = 'u8[65536]{0}', space=vmem, size = 0x10000, scoped, tag = 'input window, operand 4, single buffered']
    #allocation6 [shape = 's32[1]{0}', space=sflag, size = 0x4, scoped, tag = 'scoped memory for tpu_custom_call.1']
    #allocation7 [shape = 'u8[65536]{0}', space=vmem, size = 0x10000, scoped, tag = 'input window, operand 8, single buffered']
    #allocation8 [shape = 'u8[20480]{0}', space=vmem, size = 0x5000, scoped, tag = 'output window, operand 0, single buffered']
    %17 = vsyncpa [#allocation3], 0
    %18 = vsyncpa [#allocation6], 0
    %19 = vsyncpa [#allocation4], 0
    // Predicated region
    $region2: #{tpu_custom_call.1} parent=1 // pred_check
      _
    $region3: #{tpu_custom_call.1} parent=1 // pred_check_branch
      %21 = sbr.rel (0) target = $region5
    $region4: #{tpu_custom_call.1} parent=1 // pred_region
      _
    $region5: #{tpu_custom_call.1} parent=1 // pred_fallthru
      _
    // Predicated region
    $region6: #{tpu_custom_call.1} parent=1 // pred_check
      _
    $region7: #{tpu_custom_call.1} parent=1 // pred_check_branch
      %23 = sbr.rel (0) target = $region9
    $region8: #{tpu_custom_call.1} parent=1 // pred_region
      _
    $region9: #{tpu_custom_call.1} parent=1 // pred_fallthru
      _
    // Predicated region
    $region10: #{tpu_custom_call.1} parent=1 // pred_check
      _
    $region11: #{tpu_custom_call.1} parent=1 // pred_check_branch
      %25 = sbr.rel (0) target = $region13
    $region12: #{tpu_custom_call.1} parent=1 // pred_region
      _
    $region13: #{tpu_custom_call.1} parent=1 // pred_fallthru
      _
    // Predicated region
    $region14: #{tpu_custom_call.1} parent=1 // pred_check
      _
    $region15: #{tpu_custom_call.1} parent=1 // pred_check_branch
      %27 = sbr.rel (0) target = $region17
    $region16: #{tpu_custom_call.1} parent=1 // pred_region
      %29 = vsyncadd [#allocation3], 0
      %s30 = sshll.u32 %s3, 4
      %s31 = int_to_ptr.hbm [resolvable:$true] %s30
      %s32 = sshll.u32 [#allocation2], 4
      %s33 = int_to_ptr.vmem [resolvable:$true] %s32
      %38 = dma.hbm_to_vmem [thread:$0]  %s31, 320, %s33, [#allocation3], 64, 64, 4
    $region17: #{tpu_custom_call.1} parent=1 // pred_fallthru
      _
    // Predicated region
    $region18: #{tpu_custom_call.1} parent=1 // pred_check
      _
    $region19: #{tpu_custom_call.1} parent=1 // pred_check_branch
      %40 = sbr.rel (0) target = $region21
    $region20: #{tpu_custom_call.1} parent=1 // pred_region
      %42 = vsyncadd [#allocation6], 0
      %s43 = sshll.u32 %s4, 4
      %s44 = int_to_ptr.hbm [resolvable:$true] %s43
      %s45 = sshll.u32 [#allocation5], 4
      %s46 = int_to_ptr.vmem [resolvable:$true] %s45
      %51 = dma.hbm_to_vmem [thread:$0]  %s44, 2048, %s46, [#allocation6], 128, 128, 8
    $region21: #{tpu_custom_call.1} parent=1 // pred_fallthru
      _
    // Predicated region
    $region22: #{tpu_custom_call.1} parent=1 // pred_check
      _
    $region23: #{tpu_custom_call.1} parent=1 // pred_check_branch
      %53 = sbr.rel (0) target = $region25
    $region24: #{tpu_custom_call.1} parent=1 // pred_region
      _
    $region25: #{tpu_custom_call.1} parent=1 // pred_fallthru
      _
    // Predicated region
    $region26: #{tpu_custom_call.1} parent=1 // pred_check
      _
    $region27: #{tpu_custom_call.1} parent=1 // pred_check_branch
      %55 = sbr.rel (0) target = $region29
    $region28: #{tpu_custom_call.1} parent=1 // pred_region
      _
    $region29: #{tpu_custom_call.1} parent=1 // pred_fallthru
      _
    // Predicated region
    $region30: #{tpu_custom_call.1} parent=1 // pred_check
      _
    $region31: #{tpu_custom_call.1} parent=1 // pred_check_branch
      %57 = sbr.rel (0) target = $region33
    $region32: #{tpu_custom_call.1} parent=1 // pred_region
      _
    $region33: #{tpu_custom_call.1} parent=1 // pred_fallthru
      _
    // Predicated region
    $region34: #{tpu_custom_call.1} parent=1 // pred_check
      _
    $region35: #{tpu_custom_call.1} parent=1 // pred_check_branch
      %59 = sbr.rel (0) target = $region37
    $region36: #{tpu_custom_call.1} parent=1 // pred_region
      %61 = vsyncadd [#allocation6], 0
      %s62 = sshll.u32 %s8, 4
      %s63 = int_to_ptr.hbm [resolvable:$true] %s62
      %s64 = sshll.u32 [#allocation7], 4
      %s65 = int_to_ptr.vmem [resolvable:$true] %s64
      %70 = dma.hbm_to_vmem [thread:$0]  %s63, 2048, %s65, [#allocation6], 128, 128, 8
    $region37: #{tpu_custom_call.1} parent=1 // pred_fallthru
      _
    // Predicated region
    $region38: #{tpu_custom_call.1} parent=1 // pred_check
      _
    $region39: #{tpu_custom_call.1} parent=1 // pred_check_branch
      %72 = sbr.rel (0) target = $region41
    $region40: #{tpu_custom_call.1} parent=1 // pred_region
      _
    $region41: #{tpu_custom_call.1} parent=1 // pred_fallthru
      _
    // Predicated region
    $region42: #{tpu_custom_call.1} parent=1 // pred_check
      _
    $region43: #{tpu_custom_call.1} parent=1 // pred_check_branch
      %74 = sbr.rel (0) target = $region45
    $region44: #{tpu_custom_call.1} parent=1 // pred_region
      _
    $region45: #{tpu_custom_call.1} parent=1 // pred_fallthru
      _
    // Predicated region
    $region46: #{tpu_custom_call.1} parent=1 // pred_check
      _
    $region47: #{tpu_custom_call.1} parent=1 // pred_check_branch
      %76 = sbr.rel (0) target = $region49
    $region48: #{tpu_custom_call.1} parent=1 // pred_region
      _
    $region49: #{tpu_custom_call.1} parent=1 // pred_fallthru
      _
    // Predicated region
    $region50: #{tpu_custom_call.1} parent=1 // pred_check
      _
    $region51: #{tpu_custom_call.1} parent=1 // pred_check_branch
      %78 = sbr.rel (0) target = $region53
    $region52: #{tpu_custom_call.1} parent=1 // pred_region
      %80 = dma.done [#allocation3], 320
    $region53: #{tpu_custom_call.1} parent=1 // pred_fallthru
      _
    // Predicated region
    $region54: #{tpu_custom_call.1} parent=1 // pred_check
      _
    $region55: #{tpu_custom_call.1} parent=1 // pred_check_branch
      %82 = sbr.rel (0) target = $region57
    $region56: #{tpu_custom_call.1} parent=1 // pred_region
      %84 = dma.done [#allocation6], 2048
    $region57: #{tpu_custom_call.1} parent=1 // pred_fallthru
      _
    // Predicated region
    $region58: #{tpu_custom_call.1} parent=1 // pred_check
      _
    $region59: #{tpu_custom_call.1} parent=1 // pred_check_branch
      %86 = sbr.rel (0) target = $region61
    $region60: #{tpu_custom_call.1} parent=1 // pred_region
      %88 = dma.done [#allocation6], 2048
    $region61: #{tpu_custom_call.1} parent=1 // pred_fallthru
      _
    %v90 = vld [vmem:[#allocation2] sm:$0xf]
    %v91 = vld [vmem:[#allocation2 + $0x4] sm:$0xf]
    %v92 = vld [vmem:[#allocation2 + $0x8] sm:$0xf]
    %v93 = vld [vmem:[#allocation2 + $0xc] sm:$0xf]
    %v94 = vld [vmem:[#allocation2 + $0x10] sm:$0xf]
    %v95 = vunpack.c.l.bf16 %v90
    %v96 = vunpack.c.l.bf16 %v91
    %v97 = vunpack.c.l.bf16 %v92
    %v98 = vunpack.c.l.bf16 %v93
    %v99 = vunpack.c.l.bf16 %v94
    %vm100 = vcmp.gt.f32.partialorder %v95, 0.0
    %vm101 = vcmp.gt.f32.partialorder %v96, 0.0
    %vm102 = vcmp.gt.f32.partialorder %v97, 0.0
    %vm103 = vcmp.gt.f32.partialorder %v98, 0.0
    %vm104 = vcmp.gt.f32.partialorder %v99, 0.0
    %v105 = vsel %vm100, 0.0, -1e+30
    %v106 = vsel %vm101, 0.0, -1e+30
    %v107 = vsel %vm102, 0.0, -1e+30
    %v108 = vsel %vm103, 0.0, -1e+30
    %v109 = vsel %vm104, 0.0, -1e+30
    %v110 = vld [vmem:[%s0] sm:$0xff]
    %v111 = vld [vmem:[%s0 + $0x8] sm:$0xff]
    %v112 = vld [vmem:[%s0 + $0x10] sm:$0xff]
    %v113 = vld [vmem:[%s0 + $0x18] sm:$0xff]
    %v114 = vld [vmem:[%s0 + $0x20] sm:$0xff]
    %v115 = vpack.c.bf16 %v111, %v110
    %v116 = vpack.c.bf16 %v113, %v112
    %v117 = vpack.c.bf16 %v114, %v114
    %v118 = vld [vmem:[%s1] sm:$0xff]
    %v119 = vld [vmem:[%s1 + $0x8] sm:$0xff]
    %v120 = vld [vmem:[%s1 + $0x10] sm:$0xff]
    %v121 = vld [vmem:[%s1 + $0x18] sm:$0xff]
    %v122 = vpack.c.bf16 %v119, %v118
    %v123 = vpack.c.bf16 %v121, %v120
    %v124 = vld [vmem:[%s2] sm:$0xff]
    %v125 = vld [vmem:[%s2 + $0x8] sm:$0xff]
    %v126 = vld [vmem:[%s2 + $0x10] sm:$0xff]
    %v127 = vld [vmem:[%s2 + $0x18] sm:$0xff]
    %v128 = vld [vmem:[%s2 + $0x20] sm:$0xff]
    %vm129 = vcmask 261120
    %v131 = vsel %vm129, %v115, 0
    %v134 = vsel %vm129, %v116, 0
    %v137 = vsel %vm129, %v117, 0
    %139 = vmatpush.bf16.msra.mxu0 0
    %140 = vmatpush.bf16.msra.mxu0 0
    %141 = vmatpush.bf16.msra.mxu0 0
    %142 = vmatpush.bf16.msra.mxu0 0
    %143 = vmatpush.bf16.msra.mxu0 0
    %144 = vmatpush.bf16.msra.mxu0 0
    %145 = vmatpush.bf16.msra.mxu0 %v123
    %146 = vmatpush.bf16.msra.mxu0 %v122
    %147 = vmatmul.bf16.gmra.mxu0 %v131
    %v148 = vpop.f32.mrf.mxu0
    %v149 = vadd.f32 %v124, %v148
    %v150 = vpop.f32.mrf.mxu0
    %v151 = vadd.f32 %v125, %v150
    %152 = vmatmul.bf16.gmra.mxu0 %v134
    %v153 = vpop.f32.mrf.mxu0
    %v154 = vadd.f32 %v126, %v153
    %v155 = vpop.f32.mrf.mxu0
    %v156 = vadd.f32 %v127, %v155
    %157 = vmatmul.bf16.gmra.mxu0 %v137
    %v158 = vpop.f32.mrf.mxu0
    %v159 = vadd.f32 %v128, %v158
    %v160 = vpop.f32.mrf.mxu0
    %161 = vdwg.mxu0
    %v162 = vmax.f32 %v149, 0.0
    %v163 = vmax.f32 %v151, 0.0
    %v164 = vmax.f32 %v154, 0.0
    %v165 = vmax.f32 %v156, 0.0
    %v166 = vmax.f32 %v159, 0.0
    %v167 = vpack.c.bf16 %v163, %v162
    %v168 = vpack.c.bf16 %v165, %v164
    %v169 = vpack.c.bf16 %v166, %v166
    %v170 = vld [vmem:[#allocation5] sm:$0xff]
    %v171 = vld [vmem:[#allocation5 + $0x8] sm:$0xff]
    %v172 = vld [vmem:[#allocation5 + $0x10] sm:$0xff]
    %v173 = vld [vmem:[#allocation5 + $0x18] sm:$0xff]
    %v174 = vld [vmem:[#allocation5 + $0x20] sm:$0xff]
    %v175 = vld [vmem:[#allocation5 + $0x28] sm:$0xff]
    %v176 = vld [vmem:[#allocation5 + $0x30] sm:$0xff]
    %v177 = vld [vmem:[#allocation5 + $0x38] sm:$0xff]
    %v178 = vld [vmem:[#allocation5 + $0x40] sm:$0xff]
    %v179 = vld [vmem:[#allocation5 + $0x48] sm:$0xff]
    %v180 = vld [vmem:[#allocation5 + $0x50] sm:$0xff]
    %v181 = vld [vmem:[#allocation5 + $0x58] sm:$0xff]
    %v182 = vld [vmem:[#allocation5 + $0x60] sm:$0xff]
    %v183 = vld [vmem:[#allocation5 + $0x68] sm:$0xff]
    %v184 = vld [vmem:[#allocation5 + $0x70] sm:$0xff]
    %v185 = vld [vmem:[#allocation5 + $0x78] sm:$0xff]
    %v186 = vpack.c.bf16 %v171, %v170
    %v187 = vpack.c.bf16 %v173, %v172
    %v188 = vpack.c.bf16 %v175, %v174
    %v189 = vpack.c.bf16 %v177, %v176
    %v190 = vpack.c.bf16 %v179, %v178
    %v191 = vpack.c.bf16 %v181, %v180
    %v192 = vpack.c.bf16 %v183, %v182
    %v193 = vpack.c.bf16 %v185, %v184
    %194 = vmatpush.bf16.msra.mxu0 %v193
    %195 = vmatpush.bf16.msra.mxu0 %v192
    %196 = vmatpush.bf16.msra.mxu0 %v191
    %197 = vmatpush.bf16.msra.mxu0 %v190
    %198 = vmatpush.bf16.msra.mxu0 %v189
    %199 = vmatpush.bf16.msra.mxu0 %v188
    %200 = vmatpush.bf16.msra.mxu0 %v187
    %201 = vmatpush.bf16.msra.mxu0 %v186
    %202 = vmatmul.bf16.gmra.mxu0 %v167
    %v203 = vpop.f32.mrf.mxu0
    %v204 = vadd.f32 0.0, %v203
    %v205 = vpop.f32.mrf.mxu0
    %v206 = vadd.f32 0.0, %v205
    %207 = vmatmul.bf16.gmra.mxu0 %v168
    %v208 = vpop.f32.mrf.mxu0
    %v209 = vadd.f32 0.0, %v208
    %v210 = vpop.f32.mrf.mxu0
    %v211 = vadd.f32 0.0, %v210
    %212 = vmatmul.bf16.gmra.mxu0 %v169
    %v213 = vpop.f32.mrf.mxu0
    %v214 = vadd.f32 0.0, %v213
    %v215 = vpop.f32.mrf.mxu0
    %216 = vdwg.mxu0
    %v217 = vld [vmem:[%s5] sm:$0x1]
    %v218 = vld [vmem:[%s6] sm:$0x1]
    %v219 = vpack.c.bf16 %v206, %v204
    %v220 = vpack.c.bf16 %v211, %v209
    %v221 = vpack.c.bf16 %v214, %v214
    %v223 = vperm.slane %v218, 0
    %v225 = vmul.f32 %v204, %v223
    %v226 = vmul.f32 %v206, %v223
    %v227 = vmul.f32 %v209, %v223
    %v228 = vmul.f32 %v211, %v223
    %v229 = vmul.f32 %v214, %v223
    %230 = vadd.xlane.f32.xlu0 %v225
    %v231 = vpop.xlane.xlu0 %230
    %232 = vadd.xlane.f32.xlu0 %v226
    %v233 = vpop.xlane.xlu0 %232
    %234 = vadd.xlane.f32.xlu0 %v227
    %v235 = vpop.xlane.xlu0 %234
    %236 = vadd.xlane.f32.xlu0 %v228
    %v237 = vpop.xlane.xlu0 %236
    %238 = vadd.xlane.f32.xlu0 %v229
    %v239 = vpop.xlane.xlu0 %238
    %v240 = vpack.c.bf16 %v217, %v217
    %241 = vmatpush.bf16.xpose.msra.mxu0 0
    %242 = vmatpush.bf16.xpose.msra.mxu0 0
    %243 = vmatpush.bf16.xpose.msra.mxu0 0
    %244 = vmatpush.bf16.xpose.msra.mxu0 0
    %245 = vmatpush.bf16.xpose.msra.mxu0 0
    %246 = vmatpush.bf16.xpose.msra.mxu0 %v221
    %247 = vmatpush.bf16.xpose.msra.mxu0 %v220
    %248 = vmatpush.bf16.xpose.msra.mxu0 %v219
    %249 = vmatmul.bf16.gmra.mxu0 %v240
    %v250 = vpop.f32.mrf.mxu0
    %v251 = vadd.f32 0.0, %v250
    %v252 = vpop.f32.mrf.mxu0
    %253 = vdwg.mxu0
    %v254 = vperm.slane %v251, 0
    %v255 = vadd.f32 %v231, %v254
    %v256 = vadd.f32 %v233, %v254
    %v257 = vadd.f32 %v235, %v254
    %v258 = vadd.f32 %v237, %v254
    %v259 = vadd.f32 %v239, %v254
    %vm260 = vcmp.gt.f32.partialorder %v255, 0.0
    %vm261 = vcmp.gt.f32.partialorder %v256, 0.0
    %vm262 = vcmp.gt.f32.partialorder %v257, 0.0
    %vm263 = vcmp.gt.f32.partialorder %v258, 0.0
    %vm264 = vcmp.gt.f32.partialorder %v259, 0.0
    %v265 = vmul.f32 %v255, 0.2
    %v266 = vmul.f32 %v256, 0.2
    %v267 = vmul.f32 %v257, 0.2
    %v268 = vmul.f32 %v258, 0.2
    %v269 = vmul.f32 %v259, 0.2
    %v270 = vsel %vm260, %v255, %v265
    %v271 = vsel %vm261, %v256, %v266
    %v272 = vsel %vm262, %v257, %v267
    %v273 = vsel %vm263, %v258, %v268
    %v274 = vsel %vm264, %v259, %v269
    %v275 = vadd.f32 %v270, %v105
    %v276 = vadd.f32 %v271, %v106
    %v277 = vadd.f32 %v272, %v107
    %v278 = vadd.f32 %v273, %v108
    %v279 = vadd.f32 %v274, %v109
    %vm280 = vcmask 326656
    %v281 = vsel %vm280, %v275, -inf
    %282 = vmax.xlane.f32.xlu0 %v281
    %v283 = vpop.xlane.xlu0 %282
    %v284 = vsel %vm280, %v276, -inf
    %285 = vmax.xlane.f32.xlu0 %v284
    %v286 = vpop.xlane.xlu0 %285
    %v287 = vsel %vm280, %v277, -inf
    %288 = vmax.xlane.f32.xlu0 %v287
    %v289 = vpop.xlane.xlu0 %288
    %v290 = vsel %vm280, %v278, -inf
    %291 = vmax.xlane.f32.xlu0 %v290
    %v292 = vpop.xlane.xlu0 %291
    %v293 = vsel %vm280, %v279, -inf
    %294 = vmax.xlane.f32.xlu0 %v293
    %v295 = vpop.xlane.xlu0 %294
    %v296 = vsub.f32 %v275, %v283
    %v297 = vsub.f32 %v276, %v286
    %v298 = vsub.f32 %v277, %v289
    %v299 = vsub.f32 %v278, %v292
    %v300 = vsub.f32 %v279, %v295
    %v301 = vmul.f32 %v296, 1.442695
    %v302 = vpow.pop %v301
    %v303 = vmul.f32 %v297, 1.442695
    %v304 = vpow.pop %v303
    %v305 = vmul.f32 %v298, 1.442695
    %v306 = vpow.pop %v305
    %v307 = vmul.f32 %v299, 1.442695
    %v308 = vpow.pop %v307
    %v309 = vmul.f32 %v300, 1.442695
    %v310 = vpow.pop %v309
    %v311 = vsel %vm280, %v302, 0.0
    %312 = vadd.xlane.f32.xlu0 %v311
    %v313 = vpop.xlane.xlu0 %312
    %v314 = vsel %vm280, %v304, 0.0
    %315 = vadd.xlane.f32.xlu0 %v314
    %v316 = vpop.xlane.xlu0 %315
    %v317 = vsel %vm280, %v306, 0.0
    %318 = vadd.xlane.f32.xlu0 %v317
    %v319 = vpop.xlane.xlu0 %318
    %v320 = vsel %vm280, %v308, 0.0
    %321 = vadd.xlane.f32.xlu0 %v320
    %v322 = vpop.xlane.xlu0 %321
    %v323 = vsel %vm280, %v310, 0.0
    %324 = vadd.xlane.f32.xlu0 %v323
    %v325 = vpop.xlane.xlu0 %324
    %v326 = vpack.c.bf16 %v304, %v302
    %v327 = vpack.c.bf16 %v308, %v306
    %v328 = vpack.c.bf16 %v310, %v310
    %v330 = vsel %vm280, %v326, 0
    %v333 = vsel %vm280, %v327, 0
    %v336 = vsel %vm280, %v328, 0
    %vm338 = vcmask 1043456
    %v340 = vsel %vm338, %v221, 0
    %342 = vmatpush.bf16.msra.mxu0 0
    %343 = vmatpush.bf16.msra.mxu0 0
    %344 = vmatpush.bf16.msra.mxu0 0
    %345 = vmatpush.bf16.msra.mxu0 0
    %346 = vmatpush.bf16.msra.mxu0 0
    %347 = vmatpush.bf16.msra.mxu0 %v340
    %348 = vmatpush.bf16.msra.mxu0 %v220
    %349 = vmatpush.bf16.msra.mxu0 %v219
    %350 = vmatmul.bf16.gmra.mxu0 %v330
    %v351 = vpop.f32.mrf.mxu0
    %v352 = vadd.f32 0.0, %v351
    %v353 = vpop.f32.mrf.mxu0
    %v354 = vadd.f32 0.0, %v353
    %355 = vmatmul.bf16.gmra.mxu0 %v333
    %v356 = vpop.f32.mrf.mxu0
    %v357 = vadd.f32 0.0, %v356
    %v358 = vpop.f32.mrf.mxu0
    %v359 = vadd.f32 0.0, %v358
    %360 = vmatmul.bf16.gmra.mxu0 %v336
    %v361 = vpop.f32.mrf.mxu0
    %v362 = vadd.f32 0.0, %v361
    %v363 = vpop.f32.mrf.mxu0
    %364 = vdwg.mxu0
    %v365 = vrcp.pop %v313
    %v366 = vrcp.pop %v316
    %v367 = vrcp.pop %v319
    %v368 = vrcp.pop %v322
    %v369 = vrcp.pop %v325
    %v370 = vmul.f32 %v352, %v365
    %v371 = vmul.f32 %v354, %v366
    %v372 = vmul.f32 %v357, %v367
    %v373 = vmul.f32 %v359, %v368
    %v374 = vmul.f32 %v362, %v369
    %v375 = vld [vmem:[%s7] sm:$0x1]
    %v377 = vperm.slane %v375, 0
    %v379 = vadd.f32 %v370, %v377
    %v380 = vadd.f32 %v371, %v377
    %v381 = vadd.f32 %v372, %v377
    %v382 = vadd.f32 %v373, %v377
    %v383 = vadd.f32 %v374, %v377
    %vm384 = vcmp.gt.f32.partialorder %v379, 0.0
    %vm385 = vcmp.gt.f32.partialorder %v380, 0.0
    %vm386 = vcmp.gt.f32.partialorder %v381, 0.0
    %vm387 = vcmp.gt.f32.partialorder %v382, 0.0
    %vm388 = vcmp.gt.f32.partialorder %v383, 0.0
    %v389 = vmin.f32 %v379, 0.0
    %v390 = vmin.f32 %v380, 0.0
    %v391 = vmin.f32 %v381, 0.0
    %v392 = vmin.f32 %v382, 0.0
    %v393 = vmin.f32 %v383, 0.0
    %v394 = vmul.f32 %v389, 1.442695
    %v395 = vpow.pop %v394
    %v396 = vmul.f32 %v390, 1.442695
    %v397 = vpow.pop %v396
    %v398 = vmul.f32 %v391, 1.442695
    %v399 = vpow.pop %v398
    %v400 = vmul.f32 %v392, 1.442695
    %v401 = vpow.pop %v400
    %v402 = vmul.f32 %v393, 1.442695
    %v403 = vpow.pop %v402
    %v404 = vsub.f32 %v395, 1.0
    %v405 = vsub.f32 %v397, 1.0
    %v406 = vsub.f32 %v399, 1.0
    %v407 = vsub.f32 %v401, 1.0
    %v408 = vsub.f32 %v403, 1.0
    %v409 = vsel %vm384, %v379, %v404
    %v410 = vsel %vm385, %v380, %v405
    %v411 = vsel %vm386, %v381, %v406
    %v412 = vsel %vm387, %v382, %v407
    %v413 = vsel %vm388, %v383, %v408
    %v414 = vpack.c.bf16 %v410, %v409
    %v415 = vpack.c.bf16 %v412, %v411
    %v416 = vpack.c.bf16 %v413, %v413
    %v417 = vld [vmem:[#allocation7] sm:$0xff]
    %v418 = vld [vmem:[#allocation7 + $0x8] sm:$0xff]
    %v419 = vld [vmem:[#allocation7 + $0x10] sm:$0xff]
    %v420 = vld [vmem:[#allocation7 + $0x18] sm:$0xff]
    %v421 = vld [vmem:[#allocation7 + $0x20] sm:$0xff]
    %v422 = vld [vmem:[#allocation7 + $0x28] sm:$0xff]
    %v423 = vld [vmem:[#allocation7 + $0x30] sm:$0xff]
    %v424 = vld [vmem:[#allocation7 + $0x38] sm:$0xff]
    %v425 = vld [vmem:[#allocation7 + $0x40] sm:$0xff]
    %v426 = vld [vmem:[#allocation7 + $0x48] sm:$0xff]
    %v427 = vld [vmem:[#allocation7 + $0x50] sm:$0xff]
    %v428 = vld [vmem:[#allocation7 + $0x58] sm:$0xff]
    %v429 = vld [vmem:[#allocation7 + $0x60] sm:$0xff]
    %v430 = vld [vmem:[#allocation7 + $0x68] sm:$0xff]
    %v431 = vld [vmem:[#allocation7 + $0x70] sm:$0xff]
    %v432 = vld [vmem:[#allocation7 + $0x78] sm:$0xff]
    %v433 = vpack.c.bf16 %v418, %v417
    %v434 = vpack.c.bf16 %v420, %v419
    %v435 = vpack.c.bf16 %v422, %v421
    %v436 = vpack.c.bf16 %v424, %v423
    %v437 = vpack.c.bf16 %v426, %v425
    %v438 = vpack.c.bf16 %v428, %v427
    %v439 = vpack.c.bf16 %v430, %v429
    %v440 = vpack.c.bf16 %v432, %v431
    %441 = vmatpush.bf16.msra.mxu0 %v440
    %442 = vmatpush.bf16.msra.mxu0 %v439
    %443 = vmatpush.bf16.msra.mxu0 %v438
    %444 = vmatpush.bf16.msra.mxu0 %v437
    %445 = vmatpush.bf16.msra.mxu0 %v436
    %446 = vmatpush.bf16.msra.mxu0 %v435
    %447 = vmatpush.bf16.msra.mxu0 %v434
    %448 = vmatpush.bf16.msra.mxu0 %v433
    %449 = vmatmul.bf16.gmra.mxu0 %v414
    %v450 = vpop.f32.mrf.mxu0
    %v451 = vadd.f32 0.0, %v450
    %v452 = vpop.f32.mrf.mxu0
    %v453 = vadd.f32 0.0, %v452
    %454 = vmatmul.bf16.gmra.mxu0 %v415
    %v455 = vpop.f32.mrf.mxu0
    %v456 = vadd.f32 0.0, %v455
    %v457 = vpop.f32.mrf.mxu0
    %v458 = vadd.f32 0.0, %v457
    %459 = vmatmul.bf16.gmra.mxu0 %v416
    %v460 = vpop.f32.mrf.mxu0
    %v461 = vadd.f32 0.0, %v460
    %v462 = vpop.f32.mrf.mxu0
    %463 = vdwg.mxu0
    %v464 = vld [vmem:[%s9] sm:$0x1]
    %v465 = vld [vmem:[%s10] sm:$0x1]
    %v466 = vpack.c.bf16 %v453, %v451
    %v467 = vpack.c.bf16 %v458, %v456
    %v468 = vpack.c.bf16 %v461, %v461
    %v470 = vperm.slane %v465, 0
    %v472 = vmul.f32 %v451, %v470
    %v473 = vmul.f32 %v453, %v470
    %v474 = vmul.f32 %v456, %v470
    %v475 = vmul.f32 %v458, %v470
    %v476 = vmul.f32 %v461, %v470
    %477 = vadd.xlane.f32.xlu0 %v472
    %v478 = vpop.xlane.xlu0 %477
    %479 = vadd.xlane.f32.xlu0 %v473
    %v480 = vpop.xlane.xlu0 %479
    %481 = vadd.xlane.f32.xlu0 %v474
    %v482 = vpop.xlane.xlu0 %481
    %483 = vadd.xlane.f32.xlu0 %v475
    %v484 = vpop.xlane.xlu0 %483
    %485 = vadd.xlane.f32.xlu0 %v476
    %v486 = vpop.xlane.xlu0 %485
    %v487 = vpack.c.bf16 %v464, %v464
    %488 = vmatpush.bf16.xpose.msra.mxu0 0
    %489 = vmatpush.bf16.xpose.msra.mxu0 0
    %490 = vmatpush.bf16.xpose.msra.mxu0 0
    %491 = vmatpush.bf16.xpose.msra.mxu0 0
    %492 = vmatpush.bf16.xpose.msra.mxu0 0
    %493 = vmatpush.bf16.xpose.msra.mxu0 %v468
    %494 = vmatpush.bf16.xpose.msra.mxu0 %v467
    %495 = vmatpush.bf16.xpose.msra.mxu0 %v466
    %496 = vmatmul.bf16.gmra.mxu0 %v487
    %v497 = vpop.f32.mrf.mxu0
    %v498 = vadd.f32 0.0, %v497
    %v499 = vpop.f32.mrf.mxu0
    %500 = vdwg.mxu0
    %v501 = vperm.slane %v498, 0
    %v502 = vadd.f32 %v478, %v501
    %v503 = vadd.f32 %v480, %v501
    %v504 = vadd.f32 %v482, %v501
    %v505 = vadd.f32 %v484, %v501
    %v506 = vadd.f32 %v486, %v501
    %vm507 = vcmp.gt.f32.partialorder %v502, 0.0
    %vm508 = vcmp.gt.f32.partialorder %v503, 0.0
    %vm509 = vcmp.gt.f32.partialorder %v504, 0.0
    %vm510 = vcmp.gt.f32.partialorder %v505, 0.0
    %vm511 = vcmp.gt.f32.partialorder %v506, 0.0
    %v512 = vmul.f32 %v502, 0.2
    %v513 = vmul.f32 %v503, 0.2
    %v514 = vmul.f32 %v504, 0.2
    %v515 = vmul.f32 %v505, 0.2
    %v516 = vmul.f32 %v506, 0.2
    %v517 = vsel %vm507, %v502, %v512
    %v518 = vsel %vm508, %v503, %v513
    %v519 = vsel %vm509, %v504, %v514
    %v520 = vsel %vm510, %v505, %v515
    %v521 = vsel %vm511, %v506, %v516
    %v522 = vadd.f32 %v517, %v105
    %v523 = vadd.f32 %v518, %v106
    %v524 = vadd.f32 %v519, %v107
    %v525 = vadd.f32 %v520, %v108
    %v526 = vadd.f32 %v521, %v109
    %v527 = vsel %vm280, %v522, -inf
    %528 = vmax.xlane.f32.xlu0 %v527
    %v529 = vpop.xlane.xlu0 %528
    %v530 = vsel %vm280, %v523, -inf
    %531 = vmax.xlane.f32.xlu0 %v530
    %v532 = vpop.xlane.xlu0 %531
    %v533 = vsel %vm280, %v524, -inf
    %534 = vmax.xlane.f32.xlu0 %v533
    %v535 = vpop.xlane.xlu0 %534
    %v536 = vsel %vm280, %v525, -inf
    %537 = vmax.xlane.f32.xlu0 %v536
    %v538 = vpop.xlane.xlu0 %537
    %v539 = vsel %vm280, %v526, -inf
    %540 = vmax.xlane.f32.xlu0 %v539
    %v541 = vpop.xlane.xlu0 %540
    %v542 = vsub.f32 %v522, %v529
    %v543 = vsub.f32 %v523, %v532
    %v544 = vsub.f32 %v524, %v535
    %v545 = vsub.f32 %v525, %v538
    %v546 = vsub.f32 %v526, %v541
    %v547 = vmul.f32 %v542, 1.442695
    %v548 = vpow.pop %v547
    %v549 = vmul.f32 %v543, 1.442695
    %v550 = vpow.pop %v549
    %v551 = vmul.f32 %v544, 1.442695
    %v552 = vpow.pop %v551
    %v553 = vmul.f32 %v545, 1.442695
    %v554 = vpow.pop %v553
    %v555 = vmul.f32 %v546, 1.442695
    %v556 = vpow.pop %v555
    %v557 = vsel %vm280, %v548, 0.0
    %558 = vadd.xlane.f32.xlu0 %v557
    %v559 = vpop.xlane.xlu0 %558
    %v560 = vsel %vm280, %v550, 0.0
    %561 = vadd.xlane.f32.xlu0 %v560
    %v562 = vpop.xlane.xlu0 %561
    %v563 = vsel %vm280, %v552, 0.0
    %564 = vadd.xlane.f32.xlu0 %v563
    %v565 = vpop.xlane.xlu0 %564
    %v566 = vsel %vm280, %v554, 0.0
    %567 = vadd.xlane.f32.xlu0 %v566
    %v568 = vpop.xlane.xlu0 %567
    %v569 = vsel %vm280, %v556, 0.0
    %570 = vadd.xlane.f32.xlu0 %v569
    %v571 = vpop.xlane.xlu0 %570
    %v572 = vpack.c.bf16 %v550, %v548
    %v573 = vpack.c.bf16 %v554, %v552
    %v574 = vpack.c.bf16 %v556, %v556
    %v576 = vsel %vm280, %v572, 0
    %v579 = vsel %vm280, %v573, 0
    %v582 = vsel %vm280, %v574, 0
    %v585 = vsel %vm338, %v468, 0
    %587 = vmatpush.bf16.msra.mxu0 0
    %588 = vmatpush.bf16.msra.mxu0 0
    %589 = vmatpush.bf16.msra.mxu0 0
    %590 = vmatpush.bf16.msra.mxu0 0
    %591 = vmatpush.bf16.msra.mxu0 0
    %592 = vmatpush.bf16.msra.mxu0 %v585
    %593 = vmatpush.bf16.msra.mxu0 %v467
    %594 = vmatpush.bf16.msra.mxu0 %v466
    %595 = vmatmul.bf16.gmra.mxu0 %v576
    %v596 = vpop.f32.mrf.mxu0
    %v597 = vadd.f32 0.0, %v596
    %v598 = vpop.f32.mrf.mxu0
    %v599 = vadd.f32 0.0, %v598
    %600 = vmatmul.bf16.gmra.mxu0 %v579
    %v601 = vpop.f32.mrf.mxu0
    %v602 = vadd.f32 0.0, %v601
    %v603 = vpop.f32.mrf.mxu0
    %v604 = vadd.f32 0.0, %v603
    %605 = vmatmul.bf16.gmra.mxu0 %v582
    %v606 = vpop.f32.mrf.mxu0
    %v607 = vadd.f32 0.0, %v606
    %v608 = vpop.f32.mrf.mxu0
    %609 = vdwg.mxu0
    %v610 = vrcp.pop %v559
    %v611 = vrcp.pop %v562
    %v612 = vrcp.pop %v565
    %v613 = vrcp.pop %v568
    %v614 = vrcp.pop %v571
    %v615 = vmul.f32 %v597, %v610
    %v616 = vmul.f32 %v599, %v611
    %v617 = vmul.f32 %v602, %v612
    %v618 = vmul.f32 %v604, %v613
    %v619 = vmul.f32 %v607, %v614
    %v620 = vld [vmem:[%s11] sm:$0x1]
    %v622 = vperm.slane %v620, 0
    %v624 = vadd.f32 %v615, %v622
    %v625 = vadd.f32 %v616, %v622
    %v626 = vadd.f32 %v617, %v622
    %v627 = vadd.f32 %v618, %v622
    %v628 = vadd.f32 %v619, %v622
    %629 = vst [vmem:[#allocation8] sm:$0xff] %v624
    %630 = vst [vmem:[#allocation8 + $0x8] sm:$0xff] %v625
    %631 = vst [vmem:[#allocation8 + $0x10] sm:$0xff] %v626
    %632 = vst [vmem:[#allocation8 + $0x18] sm:$0xff] %v627
    %633 = vst [vmem:[#allocation8 + $0x20] sm:$0xff] %v628
    // Predicated region
    $region62: #{tpu_custom_call.1} parent=1 // pred_check
      _
    $region63: #{tpu_custom_call.1} parent=1 // pred_check_branch
      %635 = sbr.rel (0) target = $region65
    $region64: #{tpu_custom_call.1} parent=1 // pred_region
      %637 = vsyncadd [#allocation4], 0
      %s638 = sshll.u32 [#allocation8], 4
      %s639 = int_to_ptr.vmem [resolvable:$true] %s638
      %s640 = sshll.u32 %s12, 4
      %s641 = int_to_ptr.hbm [resolvable:$true] %s640
      %646 = dma.vmem_to_hbm [thread:$0]  %s639, 640, %s641, [#allocation4], 128, 128, 8
    $region65: #{tpu_custom_call.1} parent=1 // pred_fallthru
      _
    // Predicated region
    $region66: #{tpu_custom_call.1} parent=1 // pred_check
      _
    $region67: #{tpu_custom_call.1} parent=1 // pred_check_branch
      %648 = sbr.rel (0) target = $region69
    $region68: #{tpu_custom_call.1} parent=1 // pred_region
      %650 = dma.done [#allocation4], 640
    $region69: #{tpu_custom_call.1} parent=1 // pred_fallthru
      _
    %651 = vsyncpa [#allocation3], 1
    %652 = vsyncpa [#allocation6], 1
    %653 = vsyncpa [#allocation4], 1

</llo_original>
